<compile_context>
chip_gen: v7x
topology: tpu7x:2x2x1
jax: 0.10.0
libtpu: 0.0.40
codegen_flags: <defaults>
</compile_context>

<pallas_src>
import math

import jax
import jax.numpy as jnp
from jax.experimental import pallas as pl
from jax.experimental.pallas import tpu as pltpu

PIXNORM_EPS = 1e-8  # PixelNorm epsilon from the module


def _make_conv_pixnorm_kernel(H, W, K, C_in, C_out, batch_block, precision):
    HW = H * W
    L = batch_block * HW
    pad = K // 2
    KKC = K * K * C_in

    def kernel(x_ref, w_ref, m_ref, o_ref, rhs_ref):
        # x_ref  : (B_blk, C_in, HW)        one batch block, pixels on lanes
        # w_ref  : (C_out, K*K*C_in + 1)    scale folded in, bias = last column
        # m_ref  : (K*K, HW)                {0,1} zero-padding masks per tap
        # o_ref  : (B_blk, C_out, HW)
        # rhs_ref: VMEM scratch (K*K*C_in + 1, B_blk*HW)   im2col matrix

        # Build the im2col RHS: one XLU roll + one mask vmul + one store per tap.
        for i in range(batch_block):
            xi = x_ref[i]                                        # (C_in, HW)
            if xi.dtype != jnp.float32:
                xi = xi.astype(jnp.float32)
            for ky in range(K):
                for kx in range(K):
                    t = ky * K + kx
                    dy = ky - pad
                    dx = kx - pad
                    s = dy * W + dx
                    if s == 0:
                        src = xi
                    else:
                        # src[:, p] = xi[:, p + s] (wrapped lanes are masked below)
                        src = pltpu.roll(xi, (-s) % HW, axis=1)
                    if not (dy == 0 and dx == 0):
                        # Zero-padding semantics: kill taps that read outside
                        # the image (also kills roll wrap-around).
                        src = src * m_ref[pl.ds(t, 1), :]        # (1, HW) bcast
                    rhs_ref[pl.ds(t * C_in, C_in), pl.ds(i * HW, HW)] = src

        # Bias row: row of ones so the last weight column contributes the bias.
        rhs_ref[pl.ds(KKC, 1), :] = jnp.ones((1, L), jnp.float32)

        # Single fused conv+bias matmul on the MXU:
        #   (C_out, K*K*C_in+1) @ (K*K*C_in+1, B_blk*HW) -> (C_out, B_blk*HW)
        y = jnp.dot(
            w_ref[...],
            rhs_ref[...],
            preferred_element_type=jnp.float32,
            precision=precision,
        )

        # PixelNorm: y / sqrt(mean_c(y^2) + 1e-8)   (XLU reduce + EUP rsqrt)
        ms = jnp.sum(y * y, axis=0, keepdims=True) * (1.0 / C_out)  # (1, L)
        y = y * jax.lax.rsqrt(ms + PIXNORM_EPS)

        for i in range(batch_block):
            o_ref[i] = y[:, i * HW:(i + 1) * HW].astype(o_ref.dtype)

    return kernel


def conv_normalized_pix_forward(
    x,
    weight,
    bias,
    *,
    gain=2.0,
    stride=1,
    padding=None,
    batch_block=None,
    precision=jax.lax.Precision.HIGHEST,
):
    """x: (N, C_in, H, W); weight: (C_out, C_in, K, K); bias: (C_out,)."""
    N, C_in, H, W = x.shape
    C_out, C_in_w, KH, KW = weight.shape
    assert C_in_w == C_in and KH == KW, "weight shape mismatch"
    K = KH
    if padding is None:
        padding = K // 2
    assert stride == 1 and padding == K // 2 and K % 2 == 1, (
        "only the module's default 'same' conv (stride=1, padding=K//2) is implemented"
    )

    HW = H * W
    pad = K // 2
    scale = math.sqrt(gain / (C_in * K * K))

    if batch_block is None:
        # >= 2 parallel grid steps when N allows (feeds both v7x TensorCores),
        # while the per-step MXU RHS widens to batch_block*HW lanes as N grows
        # (amortizes per-step overhead on single-core v5e/v6e).
        batch_block = N // 2 if (N >= 2 and N % 2 == 0) else 1
    assert N % batch_block == 0, "batch_block must divide N"
    grid_n = N // batch_block

    # Pure layout glue (free row-major reshape; no activation transposes):
    x_flat = x.reshape(N, C_in, HW)

    # Weight -> (C_out, (ky,kx,c_in)) with the equalized-LR scale folded in,
    # bias appended as the last column (picked up by the kernel's ones row).
    kkc1 = K * K * C_in + 1
    w_mat = (
        jnp.transpose(weight, (0, 2, 3, 1)).reshape(C_out, K * K * C_in)
        * jnp.float32(scale)
    )
    w_mat = jnp.concatenate([w_mat, bias.reshape(C_out, 1)], axis=1)
    w_mat = w_mat.astype(jnp.float32)                          # (C_out, K*K*C_in+1)

    # Per-tap zero-padding masks, precomputed once at trace time.
    hh = jnp.arange(H).reshape(H, 1)
    ww = jnp.arange(W).reshape(1, W)
    rows = []
    for ky in range(K):
        for kx in range(K):
            dy, dx = ky - pad, kx - pad
            ok = (hh + dy >= 0) & (hh + dy < H) & (ww + dx >= 0) & (ww + dx < W)
            rows.append(ok.reshape(HW))
    masks = jnp.stack(rows, axis=0).astype(jnp.float32)        # (K*K, HW)

    # Advisory cost hint for the surrounding XLA graph.
    flops = (
        2 * N * HW * C_out * kkc1            # fused conv + bias matmul
        + N * HW * C_in * (K * K - 1)        # boundary masking
        + N * HW * (3 * C_out + 2)           # pixel norm
    )
    transcendentals = N * HW                 # rsqrt per pixel
    bytes_accessed = 4 * (x_flat.size + N * C_out * HW + w_mat.size + masks.size)

    out_flat = pl.pallas_call(
        _make_conv_pixnorm_kernel(H, W, K, C_in, C_out, batch_block, precision),
        out_shape=jax.ShapeDtypeStruct((N, C_out, HW), x.dtype),
        grid_spec=pltpu.PrefetchScalarGridSpec(
            num_scalar_prefetch=0,
            grid=(grid_n,),
            in_specs=[
                pl.BlockSpec((batch_block, C_in, HW), lambda g: (g, 0, 0)),  # x
                pl.BlockSpec((C_out, kkc1), lambda g: (0, 0)),               # weight (resident)
                pl.BlockSpec((K * K, HW), lambda g: (0, 0)),                 # masks (resident)
            ],
            out_specs=pl.BlockSpec((batch_block, C_out, HW), lambda g: (g, 0, 0)),
            scratch_shapes=[
                pltpu.VMEM((kkc1, batch_block * HW), jnp.float32),           # im2col RHS
            ],
        ),
        compiler_params=pltpu.CompilerParams(
            dimension_semantics=("parallel",),     # shards batch blocks across v7x cores
            vmem_limit_bytes=32 * 1024 * 1024,     # explicit; safe on v5e/v6e/v7x
        ),
        cost_estimate=pl.CostEstimate(
            flops=flops,
            transcendentals=transcendentals,
            bytes_accessed=bytes_accessed,
        ),
    )(x_flat, w_mat, masks)

    return out_flat.reshape(N, C_out, H, W)


def conv_normalized_pix_reference(x, weight, bias, *, gain=2.0):
    """Plain-JAX reference mirroring the PyTorch module."""
    C_out, C_in, K, _ = weight.shape
    scale = math.sqrt(gain / (C_in * K * K))
    pad = K // 2
    y = jax.lax.conv_general_dilated(
        x * scale,
        weight,
        window_strides=(1, 1),
        padding=((pad, pad), (pad, pad)),
        dimension_numbers=("NCHW", "OIHW", "NCHW"),
        precision=jax.lax.Precision.HIGHEST,
    )
    y = y + bias.reshape(1, C_out, 1, 1)
    c = y.shape[1]
    denom = jnp.sqrt(jnp.sum(y * y, axis=1, keepdims=True) / c + PIXNORM_EPS)
    return y / denom


if __name__ == "__main__":
    N, C_in, H, W = 2, 4, 16, 16
    C_out, K = 8, 3
    gain = 2.0

    key = jax.random.PRNGKey(0)
    kx, kw = jax.random.split(key, 2)

    x = jax.random.normal(kx, (N, C_in, H, W), dtype=jnp.float32)
    # EqualizedConv init: weight ~ N(0, 1), bias = 0 (deterministic init).
    weight = jax.random.normal(kw, (C_out, C_in, K, K), dtype=jnp.float32)
    bias = jnp.zeros((C_out,), dtype=jnp.float32)

    out = conv_normalized_pix_forward(x, weight, bias, gain=gain)
    out = jax.block_until_ready(out)

    ref = conv_normalized_pix_reference(x, weight, bias, gain=gain)
    assert out.shape == (N, C_out, H, W)
    max_err = float(jnp.max(jnp.abs(out - ref)))
    assert max_err < 1e-4, f"mismatch vs reference: {max_err}"

    print("KERNEL_OK")
</pallas_src>

<mosaic_0001>
module attributes {stable_mosaic.version = 11 : i64} {
  func.func @kernel(%arg0: i32, %arg1: memref<1x4x256xf32, #tpu.memory_space<vmem>>, %arg2: memref<8x37xf32, #tpu.memory_space<vmem>>, %arg3: memref<9x256xf32, #tpu.memory_space<vmem>>, %arg4: memref<1x8x256xf32, #tpu.memory_space<vmem>>, %arg5: memref<37x256xf32, #tpu.memory_space<vmem>>) attributes {dimension_semantics = [#tpu.dimension_semantics<parallel>], iteration_bounds = array<i64: 2>, scalar_prefetch = 0 : i64, scratch_operands = 1 : i64, tpu.core_type = #tpu.core_type<tc>, window_params = [{transform_indices = @transform_0, window_bounds = array<i64: 1, 4, 256>}, {pipeline_mode = #tpu.pipeline_mode<synchronous>, transform_indices = @transform_1, window_bounds = array<i64: 8, 37>}, {pipeline_mode = #tpu.pipeline_mode<synchronous>, transform_indices = @transform_2, window_bounds = array<i64: 9, 256>}, {transform_indices = @transform_3, window_bounds = array<i64: 1, 8, 256>}]} {
    %c0 = arith.constant 0 : index
    %c0_0 = arith.constant 0 : index
    %c0_1 = arith.constant 0 : index
    %0 = vector.load %arg1[%c0, %c0_0, %c0_1] : memref<1x4x256xf32, #tpu.memory_space<vmem>>, vector<1x4x256xf32>
    %1 = vector.shape_cast %0 : vector<1x4x256xf32> to vector<4x256xf32>
    %c17_i32 = arith.constant 17 : i32
    %2 = tpu.dynamic_rotate %1 by %c17_i32 dim 1 : vector<4x256xf32>, i32 -> vector<4x256xf32>
    %c0_2 = arith.constant 0 : index
    %c0_3 = arith.constant 0 : index
    %3 = vector.load %arg3[%c0_2, %c0_3] : memref<9x256xf32, #tpu.memory_space<vmem>>, vector<1x256xf32>
    %4 = vector.broadcast %3 : vector<1x256xf32> to vector<4x256xf32>
    %5 = arith.mulf %2, %4 : vector<4x256xf32>
    %c0_4 = arith.constant 0 : index
    %c0_5 = arith.constant 0 : index
    %6 = vector.load %arg5[%c0_4, %c0_5] : memref<37x256xf32, #tpu.memory_space<vmem>>, vector<4x256xf32>
    tpu.vector_store %arg5[%c0_4, %c0_5], %5 {strides = array<i32>} : memref<37x256xf32, #tpu.memory_space<vmem>>, vector<4x256xf32>,
    %c16_i32 = arith.constant 16 : i32
    %7 = tpu.dynamic_rotate %1 by %c16_i32 dim 1 : vector<4x256xf32>, i32 -> vector<4x256xf32>
    %c1 = arith.constant 1 : index
    %c0_6 = arith.constant 0 : index
    %8 = vector.load %arg3[%c1, %c0_6] : memref<9x256xf32, #tpu.memory_space<vmem>>, vector<1x256xf32>
    %9 = vector.broadcast %8 : vector<1x256xf32> to vector<4x256xf32>
    %10 = arith.mulf %7, %9 : vector<4x256xf32>
    %c4 = arith.constant 4 : index
    %c0_7 = arith.constant 0 : index
    %11 = vector.load %arg5[%c4, %c0_7] : memref<37x256xf32, #tpu.memory_space<vmem>>, vector<4x256xf32>
    tpu.vector_store %arg5[%c4, %c0_7], %10 {strides = array<i32>} : memref<37x256xf32, #tpu.memory_space<vmem>>, vector<4x256xf32>,
    %c15_i32 = arith.constant 15 : i32
    %12 = tpu.dynamic_rotate %1 by %c15_i32 dim 1 : vector<4x256xf32>, i32 -> vector<4x256xf32>
    %c2 = arith.constant 2 : index
    %c0_8 = arith.constant 0 : index
    %13 = vector.load %arg3[%c2, %c0_8] : memref<9x256xf32, #tpu.memory_space<vmem>>, vector<1x256xf32>
    %14 = vector.broadcast %13 : vector<1x256xf32> to vector<4x256xf32>
    %15 = arith.mulf %12, %14 : vector<4x256xf32>
    %c8 = arith.constant 8 : index
    %c0_9 = arith.constant 0 : index
    %16 = vector.load %arg5[%c8, %c0_9] : memref<37x256xf32, #tpu.memory_space<vmem>>, vector<4x256xf32>
    tpu.vector_store %arg5[%c8, %c0_9], %15 {strides = array<i32>} : memref<37x256xf32, #tpu.memory_space<vmem>>, vector<4x256xf32>,
    %c1_i32 = arith.constant 1 : i32
    %17 = tpu.dynamic_rotate %1 by %c1_i32 dim 1 : vector<4x256xf32>, i32 -> vector<4x256xf32>
    %c3 = arith.constant 3 : index
    %c0_10 = arith.constant 0 : index
    %18 = vector.load %arg3[%c3, %c0_10] : memref<9x256xf32, #tpu.memory_space<vmem>>, vector<1x256xf32>
    %19 = vector.broadcast %18 : vector<1x256xf32> to vector<4x256xf32>
    %20 = arith.mulf %17, %19 : vector<4x256xf32>
    %c12 = arith.constant 12 : index
    %c0_11 = arith.constant 0 : index
    %21 = vector.load %arg5[%c12, %c0_11] : memref<37x256xf32, #tpu.memory_space<vmem>>, vector<4x256xf32>
    tpu.vector_store %arg5[%c12, %c0_11], %20 {strides = array<i32>} : memref<37x256xf32, #tpu.memory_space<vmem>>, vector<4x256xf32>,
    %c16 = arith.constant 16 : index
    %c0_12 = arith.constant 0 : index
    %22 = vector.load %arg5[%c16, %c0_12] : memref<37x256xf32, #tpu.memory_space<vmem>>, vector<4x256xf32>
    tpu.vector_store %arg5[%c16, %c0_12], %1 {strides = array<i32>} : memref<37x256xf32, #tpu.memory_space<vmem>>, vector<4x256xf32>,
    %c255_i32 = arith.constant 255 : i32
    %23 = tpu.dynamic_rotate %1 by %c255_i32 dim 1 : vector<4x256xf32>, i32 -> vector<4x256xf32>
    %c5 = arith.constant 5 : index
    %c0_13 = arith.constant 0 : index
    %24 = vector.load %arg3[%c5, %c0_13] : memref<9x256xf32, #tpu.memory_space<vmem>>, vector<1x256xf32>
    %25 = vector.broadcast %24 : vector<1x256xf32> to vector<4x256xf32>
    %26 = arith.mulf %23, %25 : vector<4x256xf32>
    %c20 = arith.constant 20 : index
    %c0_14 = arith.constant 0 : index
    %27 = vector.load %arg5[%c20, %c0_14] : memref<37x256xf32, #tpu.memory_space<vmem>>, vector<4x256xf32>
    tpu.vector_store %arg5[%c20, %c0_14], %26 {strides = array<i32>} : memref<37x256xf32, #tpu.memory_space<vmem>>, vector<4x256xf32>,
    %c241_i32 = arith.constant 241 : i32
    %28 = tpu.dynamic_rotate %1 by %c241_i32 dim 1 : vector<4x256xf32>, i32 -> vector<4x256xf32>
    %c6 = arith.constant 6 : index
    %c0_15 = arith.constant 0 : index
    %29 = vector.load %arg3[%c6, %c0_15] : memref<9x256xf32, #tpu.memory_space<vmem>>, vector<1x256xf32>
    %30 = vector.broadcast %29 : vector<1x256xf32> to vector<4x256xf32>
    %31 = arith.mulf %28, %30 : vector<4x256xf32>
    %c24 = arith.constant 24 : index
    %c0_16 = arith.constant 0 : index
    %32 = vector.load %arg5[%c24, %c0_16] : memref<37x256xf32, #tpu.memory_space<vmem>>, vector<4x256xf32>
    tpu.vector_store %arg5[%c24, %c0_16], %31 {strides = array<i32>} : memref<37x256xf32, #tpu.memory_space<vmem>>, vector<4x256xf32>,
    %c240_i32 = arith.constant 240 : i32
    %33 = tpu.dynamic_rotate %1 by %c240_i32 dim 1 : vector<4x256xf32>, i32 -> vector<4x256xf32>
    %c7 = arith.constant 7 : index
    %c0_17 = arith.constant 0 : index
    %34 = vector.load %arg3[%c7, %c0_17] : memref<9x256xf32, #tpu.memory_space<vmem>>, vector<1x256xf32>
    %35 = vector.broadcast %34 : vector<1x256xf32> to vector<4x256xf32>
    %36 = arith.mulf %33, %35 : vector<4x256xf32>
    %c28 = arith.constant 28 : index
    %c0_18 = arith.constant 0 : index
    %37 = vector.load %arg5[%c28, %c0_18] : memref<37x256xf32, #tpu.memory_space<vmem>>, vector<4x256xf32>
    tpu.vector_store %arg5[%c28, %c0_18], %36 {strides = array<i32>} : memref<37x256xf32, #tpu.memory_space<vmem>>, vector<4x256xf32>,
    %c239_i32 = arith.constant 239 : i32
    %38 = tpu.dynamic_rotate %1 by %c239_i32 dim 1 : vector<4x256xf32>, i32 -> vector<4x256xf32>
    %c8_19 = arith.constant 8 : index
    %c0_20 = arith.constant 0 : index
    %39 = vector.load %arg3[%c8_19, %c0_20] : memref<9x256xf32, #tpu.memory_space<vmem>>, vector<1x256xf32>
    %40 = vector.broadcast %39 : vector<1x256xf32> to vector<4x256xf32>
    %41 = arith.mulf %38, %40 : vector<4x256xf32>
    %c32 = arith.constant 32 : index
    %c0_21 = arith.constant 0 : index
    %42 = vector.load %arg5[%c32, %c0_21] : memref<37x256xf32, #tpu.memory_space<vmem>>, vector<4x256xf32>
    tpu.vector_store %arg5[%c32, %c0_21], %41 {strides = array<i32>} : memref<37x256xf32, #tpu.memory_space<vmem>>, vector<4x256xf32>,
    %cst = arith.constant 1.000000e+00 : f32
    %43 = vector.broadcast %cst : f32 to vector<1x256xf32>
    %c36 = arith.constant 36 : index
    %c0_22 = arith.constant 0 : index
    %44 = vector.load %arg5[%c36, %c0_22] : memref<37x256xf32, #tpu.memory_space<vmem>>, vector<1x256xf32>
    tpu.vector_store %arg5[%c36, %c0_22], %43 {strides = array<i32>} : memref<37x256xf32, #tpu.memory_space<vmem>>, vector<1x256xf32>,
    %c0_23 = arith.constant 0 : index
    %c0_24 = arith.constant 0 : index
    %45 = vector.load %arg2[%c0_23, %c0_24] : memref<8x37xf32, #tpu.memory_space<vmem>>, vector<8x37xf32>
    %c0_25 = arith.constant 0 : index
    %c0_26 = arith.constant 0 : index
    %46 = vector.load %arg5[%c0_25, %c0_26] : memref<37x256xf32, #tpu.memory_space<vmem>>, vector<37x256xf32>
    %cst_27 = arith.constant dense<0.000000e+00> : vector<8x256xf32>
    %47 = tpu.matmul %45, %46, %cst_27 {dimension_numbers = #tpu.dot_dimension_numbers<[1], [0], [0], [1], [0, 0, 1, 1], [], []>, precision = #tpu.contract_precision<fp32>} : vector<8x37xf32>, vector<37x256xf32>, vector<8x256xf32> -> vector<8x256xf32>
    %48 = arith.mulf %47, %47 : vector<8x256xf32>
    %cst_28 = arith.constant dense<0.000000e+00> : vector<256xf32>
    %49 = vector.multi_reduction <add>, %48, %cst_28 [0] : vector<8x256xf32> to vector<256xf32>
    %50 = vector.shape_cast %49 : vector<256xf32> to vector<1x256xf32>
    %cst_29 = arith.constant 1.250000e-01 : f32
    %51 = vector.broadcast %cst_29 : f32 to vector<1x256xf32>
    %52 = arith.mulf %50, %51 : vector<1x256xf32>
    %cst_30 = arith.constant 9.99999993E-9 : f32
    %53 = vector.broadcast %cst_30 : f32 to vector<1x256xf32>
    %54 = arith.addf %52, %53 : vector<1x256xf32>
    %55 = math.rsqrt %54 : vector<1x256xf32>
    %56 = vector.broadcast %55 : vector<1x256xf32> to vector<8x256xf32>
    %57 = arith.mulf %47, %56 : vector<8x256xf32>
    %c0_31 = arith.constant 0 : index
    %c0_32 = arith.constant 0 : index
    %c0_33 = arith.constant 0 : index
    %58 = vector.load %arg4[%c0_31, %c0_32, %c0_33] : memref<1x8x256xf32, #tpu.memory_space<vmem>>, vector<1x8x256xf32>
    %59 = vector.shape_cast %58 : vector<1x8x256xf32> to vector<8x256xf32>
    %60 = vector.shape_cast %57 : vector<8x256xf32> to vector<1x8x256xf32>
    tpu.vector_store %arg4[%c0_31, %c0_32, %c0_33], %60 {strides = array<i32>} : memref<1x8x256xf32, #tpu.memory_space<vmem>>, vector<1x8x256xf32>,
    return
  }
  func.func @transform_0(%arg0: i32) -> (i32, i32, i32) {
    %c0_i32 = arith.constant 0 : i32
    %c0_i32_0 = arith.constant 0 : i32
    %c0_i32_1 = arith.constant 0 : i32
    return %arg0, %c0_i32, %c0_i32_0 : i32, i32, i32
  }
  func.func @transform_1(%arg0: i32) -> (i32, i32) {
    %c0_i32 = arith.constant 0 : i32
    %c0_i32_0 = arith.constant 0 : i32
    %c0_i32_1 = arith.constant 0 : i32
    return %c0_i32, %c0_i32_0 : i32, i32
  }
  func.func @transform_2(%arg0: i32) -> (i32, i32) {
    %c0_i32 = arith.constant 0 : i32
    %c0_i32_0 = arith.constant 0 : i32
    %c0_i32_1 = arith.constant 0 : i32
    return %c0_i32, %c0_i32_0 : i32, i32
  }
  func.func @transform_3(%arg0: i32) -> (i32, i32, i32) {
    %c0_i32 = arith.constant 0 : i32
    %c0_i32_0 = arith.constant 0 : i32
    %c0_i32_1 = arith.constant 0 : i32
    return %arg0, %c0_i32, %c0_i32_0 : i32, i32, i32
  }
}

</mosaic_0001>

<llo_original>
// kernel: tpu_custom_call.1
$region0: #{tpu_custom_call.1}
  #allocation0 [shape = 'u32[]', space=smem, size = 0x4, offset = 0x4, fixed_abs, tag = 'smem constant byte address 0x4 - core index']
  #allocation1 [shape = 'u32[144,128]{1,0:T(1,128)}', space=vmem, size = 0x12000, scoped, tag = 'internal scratch']
  #allocation2 [shape = 'f32[37,256]{1,0:T(8,128)}', space=vmem, size = 0xa000, scoped, tag = 'scratch operand']
  %s0 = inlined_call_operand.hbm [shape: f32[2,4,256], index: 0, kind: input, shape index: {}]
  %s1 = inlined_call_operand.hbm [shape: f32[8,37], index: 1, kind: input, shape index: {}]
  %s2 = inlined_call_operand.hbm [shape: f32[9,256], index: 2, kind: input, shape index: {}]
  %s3 = inlined_call_operand.hbm [shape: f32[2,8,256], index: 3, kind: output, shape index: {}]
  %s4 = sld [smem:[#allocation0]]
  $region57: #{tpu_custom_call.1} parent=0
    _
  %s6 = ssub.s32 1, %s4
  %s7 = scalar_select 0, %s6, %s4
  $region1: #{tpu_custom_call.1} parent=0
    #allocation3 [shape = 'u8[8192]{0}', space=vmem, size = 0x2000, scoped, tag = 'input window, operand 0']
    #allocation4 [shape = 's32[2]{0}', space=sflag, size = 0x8, scoped, tag = 'scoped memory for tpu_custom_call.1']
    #allocation5 [shape = 's32[2]{0}', space=sflag, size = 0x8, scoped, tag = 'scoped memory for tpu_custom_call.1']
    #allocation6 [shape = 'u8[4096]{0}', space=vmem, size = 0x1000, scoped, tag = 'input window, operand 1, single buffered']
    #allocation7 [shape = 's32[1]{0}', space=sflag, size = 0x4, scoped, tag = 'scoped memory for tpu_custom_call.1']
    #allocation8 [shape = 'u8[16384]{0}', space=vmem, size = 0x4000, scoped, tag = 'input window, operand 2, single buffered']
    #allocation9 [shape = 'u8[16384]{0}', space=vmem, size = 0x4000, scoped, tag = 'output window, operand 0']
    %8 = vsyncpa [#allocation4], 0
    %s9 = scalar_lea.sflag [#allocation4], 1
    %10 = vsyncpa %s9, 0
    %11 = vsyncpa [#allocation7], 0
    %12 = vsyncpa [#allocation5], 0
    %s13 = scalar_lea.sflag [#allocation5], 1
    %14 = vsyncpa %s13, 0
    loop: start=0, step=1, limit=4
    $region2: #{tpu_custom_call.1} parent=1 // loop_pre_header
      _
    $region3: #{tpu_custom_call.1} parent=1 // loop_header
      %s16 = sphi 0, %s20
      %p17 = scmp.ge.s32.totalorder %s16, 4
      %s26 = sphi 0, %s28
      %s29 = sphi 0, %s26
      %s30 = sphi 0, %s29
      %s46 = sphi 0, %s30
      %s50 = sphi 0, %s50
      %s52 = sphi 0, %s50
      %s53 = sphi 0, %s52
      %s67 = sphi 0, %s53
      %s71 = sphi 0, %s71
      %s73 = sphi 0, %s71
      %s74 = sphi 0, %s73
      %s88 = sphi 0, %s74
      %s94 = sphi 0, %s96
      %s97 = sphi 0, %s94
      %s98 = sphi 0, %s97
      %s114 = sphi 0, %s98
    $region4: #{tpu_custom_call.1} parent=1 // loop_header_branch
      %19 = sbr.rel (%p17) target = $region8
    $region5: #{tpu_custom_call.1} parent=1 // loop_body
      %s21 = ssub.s32 %s16, 1
      %s22 = ssub.s32 %s16, 2
      %s23 = sadd.s32 %s16, 1
      %s24 = ssub.s32 %s16, %s23
      %p25 = scmp.eq.s32.totalorder %s24, 0
      %s27 = sadd.s32 %s26, 1
      %s28 = scalar_select %p25, %s26, %s27
      %p31 = pneg %p25
      %p32 = scmp.eq.s32.totalorder %s16, 1
      %p33 = por %p31, %p32
      %p34 = scmp.ne.s32.totalorder %s26, %s29
      %p35 = scmp.eq.s32.totalorder %s16, 0
      %p36 = por %p34, %p35
      %p37 = scmp.ne.s32.totalorder %s26, %s29
      %p38 = scmp.eq.s32.totalorder %s21, 1
      %p39 = por %p37, %p38
      %p40 = scmp.ne.s32.totalorder %s29, %s30
      %p41 = scmp.eq.s32.totalorder %s21, 0
      %p42 = por %p40, %p41
      %p43 = scmp.ne.s32.totalorder %s29, %s30
      %p44 = scmp.eq.s32.totalorder %s22, 1
      %p45 = por %p43, %p44
      %p47 = scmp.ne.s32.totalorder %s30, %s46
      %p48 = scmp.eq.s32.totalorder %s22, 0
      %p49 = por %p47, %p48
      %s51 = sadd.s32 %s50, 1
      %p54 = scmp.eq.s32.totalorder %s16, 1
      %p55 = scmp.ne.s32.totalorder %s50, %s52
      %p56 = scmp.eq.s32.totalorder %s16, 0
      %p57 = por %p55, %p56
      %p58 = scmp.ne.s32.totalorder %s50, %s52
      %p59 = scmp.eq.s32.totalorder %s21, 1
      %p60 = por %p58, %p59
      %p61 = scmp.ne.s32.totalorder %s52, %s53
      %p62 = scmp.eq.s32.totalorder %s21, 0
      %p63 = por %p61, %p62
      %p64 = scmp.ne.s32.totalorder %s52, %s53
      %p65 = scmp.eq.s32.totalorder %s22, 1
      %p66 = por %p64, %p65
      %p68 = scmp.ne.s32.totalorder %s53, %s67
      %p69 = scmp.eq.s32.totalorder %s22, 0
      %p70 = por %p68, %p69
      %s72 = sadd.s32 %s71, 1
      %p75 = scmp.eq.s32.totalorder %s16, 1
      %p76 = scmp.ne.s32.totalorder %s71, %s73
      %p77 = scmp.eq.s32.totalorder %s16, 0
      %p78 = por %p76, %p77
      %p79 = scmp.ne.s32.totalorder %s71, %s73
      %p80 = scmp.eq.s32.totalorder %s21, 1
      %p81 = por %p79, %p80
      %p82 = scmp.ne.s32.totalorder %s73, %s74
      %p83 = scmp.eq.s32.totalorder %s21, 0
      %p84 = por %p82, %p83
      %p85 = scmp.ne.s32.totalorder %s73, %s74
      %p86 = scmp.eq.s32.totalorder %s22, 1
      %p87 = por %p85, %p86
      %p89 = scmp.ne.s32.totalorder %s74, %s88
      %p90 = scmp.eq.s32.totalorder %s22, 0
      %p91 = por %p89, %p90
      %s92 = ssub.s32 %s16, %s23
      %p93 = scmp.eq.s32.totalorder %s92, 0
      %s95 = sadd.s32 %s94, 1
      %s96 = scalar_select %p93, %s94, %s95
      %p99 = pneg %p93
      %p100 = scmp.eq.s32.totalorder %s16, 1
      %p101 = por %p99, %p100
      %p102 = scmp.ne.s32.totalorder %s94, %s97
      %p103 = scmp.eq.s32.totalorder %s16, 0
      %p104 = por %p102, %p103
      %p105 = scmp.ne.s32.totalorder %s94, %s97
      %p106 = scmp.eq.s32.totalorder %s21, 1
      %p107 = por %p105, %p106
      %p108 = scmp.ne.s32.totalorder %s97, %s98
      %p109 = scmp.eq.s32.totalorder %s21, 0
      %p110 = por %p108, %p109
      %p111 = scmp.ne.s32.totalorder %s97, %s98
      %p112 = scmp.eq.s32.totalorder %s22, 1
      %p113 = por %p111, %p112
      %p115 = scmp.ne.s32.totalorder %s98, %s114
      %p116 = scmp.eq.s32.totalorder %s22, 0
      %p117 = por %p115, %p116
      %p118 = scmp.le.s32.totalorder 1, %s16
      %p119 = scmp.lt.s32.totalorder %s16, 3
      %p120 = pnand %p118, %p119
      %p121 = pneg %p120
      // Predicated region
      $region9: #{tpu_custom_call.1} parent=5 // pred_check
        _
      $region10: #{tpu_custom_call.1} parent=5 // pred_check_branch
        %123 = sbr.rel (%p120) target = $region12
      $region11: #{tpu_custom_call.1} parent=5 // pred_region
        %s124 = ssub.s32 %s16, 1
        // Predicated region
        $region13: #{tpu_custom_call.1} parent=11 // pred_check
          %p125 = pneg %p63
        $region14: #{tpu_custom_call.1} parent=11 // pred_check_branch
          %127 = sbr.rel (%p125) target = $region16
        $region15: #{tpu_custom_call.1} parent=11 // pred_region
          %s129 = ssub.s32 128, 128
          %130 = vsyncadd [#allocation7], %s129
          %s132 = sshll.u32 [#allocation6], 4
          %s133 = int_to_ptr.vmem [resolvable:$true] %s132
          %135 = dma.hbm_to_vmem [thread:$0]  %s1, 128, %s133, [#allocation7]
        $region16: #{tpu_custom_call.1} parent=11 // pred_fallthru
          _
        // Predicated region
        $region17: #{tpu_custom_call.1} parent=11 // pred_check
          %p136 = pneg %p84
        $region18: #{tpu_custom_call.1} parent=11 // pred_check_branch
          %138 = sbr.rel (%p136) target = $region20
        $region19: #{tpu_custom_call.1} parent=11 // pred_region
          %s140 = ssub.s32 512, 512
          %141 = vsyncadd [#allocation7], %s140
          %s142 = sshll.u32 [#allocation8], 4
          %s143 = int_to_ptr.vmem [resolvable:$true] %s142
          %148 = dma.hbm_to_vmem [thread:$0]  %s2, 512, %s143, [#allocation7], 256, 256, 16
        $region20: #{tpu_custom_call.1} parent=11 // pred_fallthru
          _
      $region12: #{tpu_custom_call.1} parent=5 // pred_fallthru
        _
      %p149 = scmp.lt.s32.totalorder %s16, 2
      // Predicated region
      $region21: #{tpu_custom_call.1} parent=5 // pred_check
        %p150 = pneg %p149
      $region22: #{tpu_custom_call.1} parent=5 // pred_check_branch
        %152 = sbr.rel (%p150) target = $region24
      $region23: #{tpu_custom_call.1} parent=5 // pred_region
        // Predicated region
        $region25: #{tpu_custom_call.1} parent=23 // pred_check
          %p153 = pneg %p36
        $region26: #{tpu_custom_call.1} parent=23 // pred_check_branch
          %155 = sbr.rel (%p153) target = $region28
        $region27: #{tpu_custom_call.1} parent=23 // pred_region
          %s156 = sand.u32 %s26, 1
          %s157 = scalar_lea.sflag [#allocation4], %s156
          %s158 = sand.u32 %s26, 1
          %s159 = smul.addr %s158, 8
          %s160 = scalar_lea.vmem [#allocation3], %s159
          %s162 = ssub.s32 128, 128
          %163 = vsyncadd %s157, %s162
          %s164 = smul.addr %s16, 2
          %s165 = smul.addr %s164, 64
          %s166 = scalar_lea.hbm %s0, %s165
          %s168 = sshll.u32 %s160, 4
          %s169 = int_to_ptr.vmem [resolvable:$true] %s168
          %171 = dma.hbm_to_vmem [thread:$0]  %s166, 128, %s169, %s157
        $region28: #{tpu_custom_call.1} parent=23 // pred_fallthru
          _
      $region24: #{tpu_custom_call.1} parent=5 // pred_fallthru
        _
      %p172 = scmp.le.s32.totalorder 1, %s16
      %p173 = scmp.lt.s32.totalorder %s16, 3
      %p174 = pnand %p172, %p173
      %p175 = pneg %p174
      // Predicated region
      $region29: #{tpu_custom_call.1} parent=5 // pred_check
        _
      $region30: #{tpu_custom_call.1} parent=5 // pred_check_branch
        %177 = sbr.rel (%p174) target = $region32
      $region31: #{tpu_custom_call.1} parent=5 // pred_region
        %s178 = ssub.s32 %s16, 1
        %s179 = sand.u32 %s29, 1
        %s180 = scalar_lea.sflag [#allocation4], %s179
        %s181 = sand.u32 %s29, 1
        %s182 = smul.addr %s181, 8
        %s183 = scalar_lea.vmem [#allocation3], %s182
        // Predicated region
        $region33: #{tpu_custom_call.1} parent=31 // pred_check
          %p184 = pneg %p42
        $region34: #{tpu_custom_call.1} parent=31 // pred_check_branch
          %186 = sbr.rel (%p184) target = $region36
        $region35: #{tpu_custom_call.1} parent=31 // pred_region
          %187 = dma.done %s180, 128
        $region36: #{tpu_custom_call.1} parent=31 // pred_fallthru
          _
        // Predicated region
        $region37: #{tpu_custom_call.1} parent=31 // pred_check
          %p188 = pneg %p63
        $region38: #{tpu_custom_call.1} parent=31 // pred_check_branch
          %190 = sbr.rel (%p188) target = $region40
        $region39: #{tpu_custom_call.1} parent=31 // pred_region
          %191 = dma.done [#allocation7], 128
        $region40: #{tpu_custom_call.1} parent=31 // pred_fallthru
          _
        // Predicated region
        $region41: #{tpu_custom_call.1} parent=31 // pred_check
          %p192 = pneg %p84
        $region42: #{tpu_custom_call.1} parent=31 // pred_check_branch
          %194 = sbr.rel (%p192) target = $region44
        $region43: #{tpu_custom_call.1} parent=31 // pred_region
          %195 = dma.done [#allocation7], 512
        $region44: #{tpu_custom_call.1} parent=31 // pred_fallthru
          _
        %s196 = sand.u32 %s29, 1
        %s197 = scalar_lea.sflag [#allocation4], %s196
        %s198 = sand.u32 %s29, 1
        %s199 = smul.addr %s198, 8
        %s200 = scalar_lea.vmem [#allocation3], %s199
        %p201 = pneg %p42
        %p202 = pneg %p39
        %p203 = pneg %p63
        %p204 = pneg %p60
        %p205 = pneg %p84
        %p206 = pneg %p81
        %p207 = pneg %p110
        %p208 = pneg %p107
        %s209 = sand.u32 %s97, 1
        %s210 = scalar_lea.sflag [#allocation5], %s209
        %s211 = sand.u32 %s97, 1
        %s212 = smul.addr %s211, 16
        %s213 = scalar_lea.vmem [#allocation9], %s212
        %v214 = vld [vmem:[%s183] sm:$0xff]
        %v216 = vcombine.high %v214, %v214
        %218 = vrot.lane.b32.xlu0 %v214, 17
        %v219 = vpop.permute.xlu0 %218
        %220 = vrot.lane.b32.xlu0 %v216, 17
        %v221 = vpop.permute.xlu0 %220
        %v222 = vlaneseq
        %v223 = vand.u32 %v222, 127
        %vm224 = vcmp.lt.s32.totalorder %v223, 17
        %v225 = vsel %vm224, %v219, %v221
        %v226 = vsel %vm224, %v221, %v219
        %v227 = vld [vmem:[#allocation8] ss:$8 sm:$0x3]
        %v229 = vlaneseq
        %v230 = vshrl.u32 %v229, 7
        %v231 = vsub.s32 0, %v230
        %v232 = vrot.slane %v227, %v231
        %v233 = vlaneseq
        %v234 = vshrl.u32 %v233, 7
        %v235 = vsub.s32 1, %v234
        %v236 = vrot.slane %v227, %v235
        %v239 = vmul.f32 %v226, %v232
        %v240 = vmul.f32 %v225, %v236
        %241 = vst [vmem:[#allocation2] sm:$0xf] %v239
        %242 = vst [vmem:[#allocation2 + $0x8] sm:$0xf] %v240
        %243 = vrot.lane.b32.xlu0 %v214, 16
        %v244 = vpop.permute.xlu0 %243
        %245 = vrot.lane.b32.xlu0 %v216, 16
        %v246 = vpop.permute.xlu0 %245
        %vm247 = vcmp.lt.s32.totalorder %v223, 16
        %v248 = vsel %vm247, %v244, %v246
        %v249 = vsel %vm247, %v246, %v244
        %s250 = scalar_lea.vmem [#allocation8], 1
        %v251 = vld [vmem:[%s250] ss:$8 sm:$0x3]
        %v253 = vlaneseq
        %v254 = vshrl.u32 %v253, 7
        %v255 = vsub.s32 0, %v254
        %v256 = vrot.slane %v251, %v255
        %v257 = vlaneseq
        %v258 = vshrl.u32 %v257, 7
        %v259 = vsub.s32 1, %v258
        %v260 = vrot.slane %v251, %v259
        %v263 = vmul.f32 %v249, %v256
        %v264 = vmul.f32 %v248, %v260
        %v267 = vrot.slane %v263, 4
        %v268 = vrot.slane %v264, 4
        %271 = vst [vmem:[#allocation2] sm:$0xf0] %v267
        %272 = vst [vmem:[#allocation2 + $0x8] sm:$0xf0] %v268
        %273 = vrot.lane.b32.xlu0 %v214, 15
        %v274 = vpop.permute.xlu0 %273
        %275 = vrot.lane.b32.xlu0 %v216, 15
        %v276 = vpop.permute.xlu0 %275
        %vm277 = vcmp.lt.s32.totalorder %v223, 15
        %v278 = vsel %vm277, %v274, %v276
        %v279 = vsel %vm277, %v276, %v274
        %s280 = scalar_lea.vmem [#allocation8], 2
        %v281 = vld [vmem:[%s280] ss:$8 sm:$0x3]
        %v283 = vlaneseq
        %v284 = vshrl.u32 %v283, 7
        %v285 = vsub.s32 0, %v284
        %v286 = vrot.slane %v281, %v285
        %v287 = vlaneseq
        %v288 = vshrl.u32 %v287, 7
        %v289 = vsub.s32 1, %v288
        %v290 = vrot.slane %v281, %v289
        %v293 = vmul.f32 %v279, %v286
        %v294 = vmul.f32 %v278, %v290
        %295 = vst [vmem:[#allocation2 + $0x10] sm:$0xf] %v293
        %296 = vst [vmem:[#allocation2 + $0x18] sm:$0xf] %v294
        %297 = vrot.lane.b32.xlu0 %v214, 1
        %v298 = vpop.permute.xlu0 %297
        %299 = vrot.lane.b32.xlu0 %v216, 1
        %v300 = vpop.permute.xlu0 %299
        %vm301 = vcmp.lt.s32.totalorder %v223, 1
        %v302 = vsel %vm301, %v298, %v300
        %v303 = vsel %vm301, %v300, %v298
        %s304 = scalar_lea.vmem [#allocation8], 3
        %v305 = vld [vmem:[%s304] ss:$8 sm:$0x3]
        %v307 = vlaneseq
        %v308 = vshrl.u32 %v307, 7
        %v309 = vsub.s32 0, %v308
        %v310 = vrot.slane %v305, %v309
        %v311 = vlaneseq
        %v312 = vshrl.u32 %v311, 7
        %v313 = vsub.s32 1, %v312
        %v314 = vrot.slane %v305, %v313
        %v317 = vmul.f32 %v303, %v310
        %v318 = vmul.f32 %v302, %v314
        %v321 = vrot.slane %v317, 4
        %v322 = vrot.slane %v318, 4
        %325 = vst [vmem:[#allocation2 + $0x10] sm:$0xf0] %v321
        %326 = vst [vmem:[#allocation2 + $0x18] sm:$0xf0] %v322
        %327 = vst [vmem:[#allocation2 + $0x20] sm:$0xf] %v214
        %328 = vst [vmem:[#allocation2 + $0x28] sm:$0xf] %v216
        %329 = vrot.lane.b32.xlu0 %v214, 127
        %v330 = vpop.permute.xlu0 %329
        %331 = vrot.lane.b32.xlu0 %v216, 127
        %v332 = vpop.permute.xlu0 %331
        %vm333 = vcmp.lt.s32.totalorder %v223, 127
        %v334 = vsel %vm333, %v330, %v332
        %v335 = vsel %vm333, %v332, %v330
        %s336 = scalar_lea.vmem [#allocation8], 5
        %v337 = vld [vmem:[%s336] ss:$8 sm:$0x3]
        %v339 = vlaneseq
        %v340 = vshrl.u32 %v339, 7
        %v341 = vsub.s32 0, %v340
        %v342 = vrot.slane %v337, %v341
        %v343 = vlaneseq
        %v344 = vshrl.u32 %v343, 7
        %v345 = vsub.s32 1, %v344
        %v346 = vrot.slane %v337, %v345
        %v349 = vmul.f32 %v334, %v342
        %v350 = vmul.f32 %v335, %v346
        %v353 = vrot.slane %v349, 4
        %v354 = vrot.slane %v350, 4
        %357 = vst [vmem:[#allocation2 + $0x20] sm:$0xf0] %v353
        %358 = vst [vmem:[#allocation2 + $0x28] sm:$0xf0] %v354
        %359 = vrot.lane.b32.xlu0 %v214, 113
        %v360 = vpop.permute.xlu0 %359
        %361 = vrot.lane.b32.xlu0 %v216, 113
        %v362 = vpop.permute.xlu0 %361
        %vm363 = vcmp.lt.s32.totalorder %v223, 113
        %v364 = vsel %vm363, %v360, %v362
        %v365 = vsel %vm363, %v362, %v360
        %s366 = scalar_lea.vmem [#allocation8], 6
        %v367 = vld [vmem:[%s366] ss:$8 sm:$0x3]
        %v369 = vlaneseq
        %v370 = vshrl.u32 %v369, 7
        %v371 = vsub.s32 0, %v370
        %v372 = vrot.slane %v367, %v371
        %v373 = vlaneseq
        %v374 = vshrl.u32 %v373, 7
        %v375 = vsub.s32 1, %v374
        %v376 = vrot.slane %v367, %v375
        %v379 = vmul.f32 %v364, %v372
        %v380 = vmul.f32 %v365, %v376
        %381 = vst [vmem:[#allocation2 + $0x30] sm:$0xf] %v379
        %382 = vst [vmem:[#allocation2 + $0x38] sm:$0xf] %v380
        %383 = vrot.lane.b32.xlu0 %v214, 112
        %v384 = vpop.permute.xlu0 %383
        %385 = vrot.lane.b32.xlu0 %v216, 112
        %v386 = vpop.permute.xlu0 %385
        %vm387 = vcmp.lt.s32.totalorder %v223, 112
        %v388 = vsel %vm387, %v384, %v386
        %v389 = vsel %vm387, %v386, %v384
        %s390 = scalar_lea.vmem [#allocation8], 7
        %v391 = vld [vmem:[%s390] ss:$8 sm:$0x3]
        %v393 = vlaneseq
        %v394 = vshrl.u32 %v393, 7
        %v395 = vsub.s32 0, %v394
        %v396 = vrot.slane %v391, %v395
        %v397 = vlaneseq
        %v398 = vshrl.u32 %v397, 7
        %v399 = vsub.s32 1, %v398
        %v400 = vrot.slane %v391, %v399
        %v403 = vmul.f32 %v388, %v396
        %v404 = vmul.f32 %v389, %v400
        %v407 = vrot.slane %v403, 4
        %v408 = vrot.slane %v404, 4
        %411 = vst [vmem:[#allocation2 + $0x30] sm:$0xf0] %v407
        %412 = vst [vmem:[#allocation2 + $0x38] sm:$0xf0] %v408
        %413 = vrot.lane.b32.xlu0 %v214, 111
        %v414 = vpop.permute.xlu0 %413
        %415 = vrot.lane.b32.xlu0 %v216, 111
        %v416 = vpop.permute.xlu0 %415
        %vm417 = vcmp.lt.s32.totalorder %v223, 111
        %v418 = vsel %vm417, %v414, %v416
        %v419 = vsel %vm417, %v416, %v414
        %s420 = scalar_lea.vmem [#allocation8], 16
        %v421 = vld [vmem:[%s420] ss:$8 sm:$0x3]
        %v423 = vlaneseq
        %v424 = vshrl.u32 %v423, 7
        %v425 = vsub.s32 0, %v424
        %v426 = vrot.slane %v421, %v425
        %v427 = vlaneseq
        %v428 = vshrl.u32 %v427, 7
        %v429 = vsub.s32 1, %v428
        %v430 = vrot.slane %v421, %v429
        %v433 = vmul.f32 %v418, %v426
        %v434 = vmul.f32 %v419, %v430
        %435 = vst [vmem:[#allocation2 + $0x40] sm:$0xf] %v433
        %436 = vst [vmem:[#allocation2 + $0x48] sm:$0xf] %v434
        %v437 = vlaneseq
        %vm438 = vcmp.ge.s32.totalorder %v437, 0
        %vm439 = vcmp.lt.s32.totalorder %v437, 256
        %vm440 = vmand %vm438, %vm439
        %s441 = scalar_lea.vmem [#allocation2], 68
        %442 = vst.msk [vmem:[%s441] ss:$8 sm:$0x3] %vm440, 1.0
        %443 = vst.msk [vmem:[%s441] ss:$8 sm:$0x0] %vm440, 1.0
        %v444 = vld [vmem:[#allocation6] sm:$0xff]
        %v445 = vld [vmem:[#allocation2] sm:$0xff]
        %v446 = vld [vmem:[#allocation2 + $0x8] sm:$0xff]
        %v447 = vld [vmem:[#allocation2 + $0x10] sm:$0xff]
        %v448 = vld [vmem:[#allocation2 + $0x18] sm:$0xff]
        %v449 = vld [vmem:[#allocation2 + $0x20] sm:$0xff]
        %v450 = vld [vmem:[#allocation2 + $0x28] sm:$0xff]
        %v451 = vld [vmem:[#allocation2 + $0x30] sm:$0xff]
        %v452 = vld [vmem:[#allocation2 + $0x38] sm:$0xff]
        %v453 = vld [vmem:[#allocation2 + $0x40] sm:$0x1f]
        %v454 = vld [vmem:[#allocation2 + $0x48] sm:$0x1f]
        %vm455 = vcmask 302080
        %v457 = vsel %vm455, %v444, 0
        %vm459 = vcmask 1044480
        %v461 = vsel %vm459, %v453, 0
        %v464 = vsel %vm459, %v454, 0
        %v466 = vand.u32 %v446, 4294901760
        %467 = vmatprep.subr.mxu0 %v466
        %v468 = vand.u32 %v445, 4294901760
        %469 = vmatpush1.msra.mxu0 %v468
        %v470 = vand.u32 %v448, 4294901760
        %471 = vmatprep.subr.mxu0 %v470
        %v472 = vand.u32 %v447, 4294901760
        %473 = vmatpush1.msra.mxu0 %v472
        %v474 = vand.u32 %v450, 4294901760
        %475 = vmatprep.subr.mxu0 %v474
        %v476 = vand.u32 %v449, 4294901760
        %477 = vmatpush1.msra.mxu0 %v476
        %v478 = vand.u32 %v452, 4294901760
        %479 = vmatprep.subr.mxu0 %v478
        %v480 = vand.u32 %v451, 4294901760
        %481 = vmatpush1.msra.mxu0 %v480
        %v482 = vand.u32 %v464, 4294901760
        %483 = vmatprep.subr.mxu0 %v482
        %v484 = vand.u32 %v461, 4294901760
        %485 = vmatpush1.msra.mxu0 %v484
        %486 = vmatprep.subr.mxu0 0.0
        %487 = vmatpush1.msra.mxu0 0.0
        %488 = vmatprep.subr.mxu0 0.0
        %489 = vmatpush1.msra.mxu0 0.0
        %490 = vmatprep.subr.mxu0 0.0
        %491 = vmatpush1.msra.mxu0 0.0
        %492 = vmatprep.subr.mxu0 0.0
        %493 = vmatpush1.msra.mxu0 0.0
        %494 = vmatprep.subr.mxu0 0.0
        %495 = vmatpush1.msra.mxu0 0.0
        %496 = vmatprep.subr.mxu0 0.0
        %497 = vmatpush1.msra.mxu0 0.0
        %498 = vmatprep.subr.mxu0 0.0
        %499 = vmatpush1.msra.mxu0 0.0
        %500 = vmatprep.subr.mxu0 0.0
        %501 = vmatpush1.msra.mxu0 0.0
        %502 = vmatprep.subr.mxu0 0.0
        %503 = vmatpush1.msra.mxu0 0.0
        %504 = vmatprep.subr.mxu0 0.0
        %505 = vmatpush1.msra.mxu0 0.0
        %506 = vmatprep.subr.mxu0 0.0
        %507 = vmatpush1.msra.mxu0 0.0
        %508 = vmatprep.subr.mxu0 0.0
        %509 = vmatpush1.msra.mxu0 0.0
        %510 = vmatprep.subr.mxu0 0.0
        %511 = vmatpush1.msra.mxu0 0.0
        %512 = vmatprep.subr.mxu0 0.0
        %513 = vmatpush1.msra.mxu0 0.0
        %514 = vmatprep.subr.mxu0 0.0
        %515 = vmatpush1.msra.mxu0 0.0
        %516 = vmatprep.subr.mxu0 0.0
        %517 = vmatpush1.msra.mxu0 0.0
        %518 = vmatprep.subr.mxu0 0.0
        %519 = vmatpush1.msra.mxu0 0.0
        %520 = vmatprep.subr.mxu0 0.0
        %521 = vmatpush1.msra.mxu0 0.0
        %522 = vmatprep.subr.mxu0 0.0
        %523 = vmatpush1.msra.mxu0 0.0
        %524 = vmatprep.subr.mxu0 0.0
        %525 = vmatpush1.msra.mxu0 0.0
        %526 = vmatprep.subr.mxu0 0.0
        %527 = vmatpush1.msra.mxu0 0.0
        %528 = vmatprep.subr.mxu0 0.0
        %529 = vmatpush1.msra.mxu0 0.0
        %530 = vmatprep.subr.mxu0 0.0
        %531 = vmatpush1.msra.mxu0 0.0
        %532 = vmatprep.subr.mxu0 0.0
        %533 = vmatpush1.msra.mxu0 0.0
        %534 = vmatprep.subr.mxu0 0.0
        %535 = vmatpush1.msra.mxu0 0.0
        %536 = vmatprep.subr.mxu0 0.0
        %537 = vmatpush1.msra.mxu0 0.0
        %538 = vmatprep.subr.mxu0 0.0
        %539 = vmatpush1.msra.mxu0 0.0
        %540 = vmatprep.mubr.f32.mxu0 0.0
        %v541 = vand.u32 %v457, 4294901760
        %v542 = vsub.f32 %v457, %v541
        %v543 = vand.u32 %v542, 4294901760
        %v544 = vsub.f32 %v542, %v543
        %v545 = vand.u32 %v544, 4294901760
        %546 = vmatmul.mubr.f32.gmra.mrb[0].mxu0 %v545
        %v547 = vpop.f32.mrb[0].mxu0
        %v548 = vadd.f32 0.0, %v547
        %v549 = vpop.f32.mrb[0].mxu0
        %v550 = vadd.f32 0.0, %v549
        %551 = vdwg.mxu0
        %v552 = vand.u32 %v446, 4294901760
        %v553 = vsub.f32 %v446, %v552
        %v554 = vand.u32 %v553, 4294901760
        %v555 = vsub.f32 %v553, %v554
        %v556 = vand.u32 %v555, 4294901760
        %557 = vmatprep.subr.mxu0 %v556
        %v558 = vand.u32 %v445, 4294901760
        %v559 = vsub.f32 %v445, %v558
        %v560 = vand.u32 %v559, 4294901760
        %v561 = vsub.f32 %v559, %v560
        %v562 = vand.u32 %v561, 4294901760
        %563 = vmatpush1.msra.mxu0 %v562
        %v564 = vand.u32 %v448, 4294901760
        %v565 = vsub.f32 %v448, %v564
        %v566 = vand.u32 %v565, 4294901760
        %v567 = vsub.f32 %v565, %v566
        %v568 = vand.u32 %v567, 4294901760
        %569 = vmatprep.subr.mxu0 %v568
        %v570 = vand.u32 %v447, 4294901760
        %v571 = vsub.f32 %v447, %v570
        %v572 = vand.u32 %v571, 4294901760
        %v573 = vsub.f32 %v571, %v572
        %v574 = vand.u32 %v573, 4294901760
        %575 = vmatpush1.msra.mxu0 %v574
        %v576 = vand.u32 %v450, 4294901760
        %v577 = vsub.f32 %v450, %v576
        %v578 = vand.u32 %v577, 4294901760
        %v579 = vsub.f32 %v577, %v578
        %v580 = vand.u32 %v579, 4294901760
        %581 = vmatprep.subr.mxu0 %v580
        %v582 = vand.u32 %v449, 4294901760
        %v583 = vsub.f32 %v449, %v582
        %v584 = vand.u32 %v583, 4294901760
        %v585 = vsub.f32 %v583, %v584
        %v586 = vand.u32 %v585, 4294901760
        %587 = vmatpush1.msra.mxu0 %v586
        %v588 = vand.u32 %v452, 4294901760
        %v589 = vsub.f32 %v452, %v588
        %v590 = vand.u32 %v589, 4294901760
        %v591 = vsub.f32 %v589, %v590
        %v592 = vand.u32 %v591, 4294901760
        %593 = vmatprep.subr.mxu0 %v592
        %v594 = vand.u32 %v451, 4294901760
        %v595 = vsub.f32 %v451, %v594
        %v596 = vand.u32 %v595, 4294901760
        %v597 = vsub.f32 %v595, %v596
        %v598 = vand.u32 %v597, 4294901760
        %599 = vmatpush1.msra.mxu0 %v598
        %v600 = vand.u32 %v464, 4294901760
        %v601 = vsub.f32 %v464, %v600
        %v602 = vand.u32 %v601, 4294901760
        %v603 = vsub.f32 %v601, %v602
        %v604 = vand.u32 %v603, 4294901760
        %605 = vmatprep.subr.mxu0 %v604
        %v606 = vand.u32 %v461, 4294901760
        %v607 = vsub.f32 %v461, %v606
        %v608 = vand.u32 %v607, 4294901760
        %v609 = vsub.f32 %v607, %v608
        %v610 = vand.u32 %v609, 4294901760
        %611 = vmatpush1.msra.mxu0 %v610
        %612 = vmatprep.subr.mxu0 0.0
        %613 = vmatpush1.msra.mxu0 0.0
        %614 = vmatprep.subr.mxu0 0.0
        %615 = vmatpush1.msra.mxu0 0.0
        %616 = vmatprep.subr.mxu0 0.0
        %617 = vmatpush1.msra.mxu0 0.0
        %618 = vmatprep.subr.mxu0 0.0
        %619 = vmatpush1.msra.mxu0 0.0
        %620 = vmatprep.subr.mxu0 0.0
        %621 = vmatpush1.msra.mxu0 0.0
        %622 = vmatprep.subr.mxu0 0.0
        %623 = vmatpush1.msra.mxu0 0.0
        %624 = vmatprep.subr.mxu0 0.0
        %625 = vmatpush1.msra.mxu0 0.0
        %626 = vmatprep.subr.mxu0 0.0
        %627 = vmatpush1.msra.mxu0 0.0
        %628 = vmatprep.subr.mxu0 0.0
        %629 = vmatpush1.msra.mxu0 0.0
        %630 = vmatprep.subr.mxu0 0.0
        %631 = vmatpush1.msra.mxu0 0.0
        %632 = vmatprep.subr.mxu0 0.0
        %633 = vmatpush1.msra.mxu0 0.0
        %634 = vmatprep.subr.mxu0 0.0
        %635 = vmatpush1.msra.mxu0 0.0
        %636 = vmatprep.subr.mxu0 0.0
        %637 = vmatpush1.msra.mxu0 0.0
        %638 = vmatprep.subr.mxu0 0.0
        %639 = vmatpush1.msra.mxu0 0.0
        %640 = vmatprep.subr.mxu0 0.0
        %641 = vmatpush1.msra.mxu0 0.0
        %642 = vmatprep.subr.mxu0 0.0
        %643 = vmatpush1.msra.mxu0 0.0
        %644 = vmatprep.subr.mxu0 0.0
        %645 = vmatpush1.msra.mxu0 0.0
        %646 = vmatprep.subr.mxu0 0.0
        %647 = vmatpush1.msra.mxu0 0.0
        %648 = vmatprep.subr.mxu0 0.0
        %649 = vmatpush1.msra.mxu0 0.0
        %650 = vmatprep.subr.mxu0 0.0
        %651 = vmatpush1.msra.mxu0 0.0
        %652 = vmatprep.subr.mxu0 0.0
        %653 = vmatpush1.msra.mxu0 0.0
        %654 = vmatprep.subr.mxu0 0.0
        %655 = vmatpush1.msra.mxu0 0.0
        %656 = vmatprep.subr.mxu0 0.0
        %657 = vmatpush1.msra.mxu0 0.0
        %658 = vmatprep.subr.mxu0 0.0
        %659 = vmatpush1.msra.mxu0 0.0
        %660 = vmatprep.subr.mxu0 0.0
        %661 = vmatpush1.msra.mxu0 0.0
        %662 = vmatprep.subr.mxu0 0.0
        %663 = vmatpush1.msra.mxu0 0.0
        %664 = vmatprep.subr.mxu0 0.0
        %665 = vmatpush1.msra.mxu0 0.0
        %666 = vmatprep.mubr.f32.mxu0 0.0
        %v667 = vand.u32 %v457, 4294901760
        %668 = vmatmul.mubr.f32.gmra.mrb[0].mxu0 %v667
        %v669 = vpop.f32.mrb[0].mxu0
        %v670 = vadd.f32 %v548, %v669
        %v671 = vpop.f32.mrb[0].mxu0
        %v672 = vadd.f32 %v550, %v671
        %673 = vdwg.mxu0
        %v674 = vand.u32 %v446, 4294901760
        %v675 = vsub.f32 %v446, %v674
        %676 = vmatprep.subr.mxu0 %v675
        %v677 = vand.u32 %v445, 4294901760
        %v678 = vsub.f32 %v445, %v677
        %679 = vmatpush1.msra.mxu0 %v678
        %v680 = vand.u32 %v448, 4294901760
        %v681 = vsub.f32 %v448, %v680
        %682 = vmatprep.subr.mxu0 %v681
        %v683 = vand.u32 %v447, 4294901760
        %v684 = vsub.f32 %v447, %v683
        %685 = vmatpush1.msra.mxu0 %v684
        %v686 = vand.u32 %v450, 4294901760
        %v687 = vsub.f32 %v450, %v686
        %688 = vmatprep.subr.mxu0 %v687
        %v689 = vand.u32 %v449, 4294901760
        %v690 = vsub.f32 %v449, %v689
        %691 = vmatpush1.msra.mxu0 %v690
        %v692 = vand.u32 %v452, 4294901760
        %v693 = vsub.f32 %v452, %v692
        %694 = vmatprep.subr.mxu0 %v693
        %v695 = vand.u32 %v451, 4294901760
        %v696 = vsub.f32 %v451, %v695
        %697 = vmatpush1.msra.mxu0 %v696
        %v698 = vand.u32 %v464, 4294901760
        %v699 = vsub.f32 %v464, %v698
        %700 = vmatprep.subr.mxu0 %v699
        %v701 = vand.u32 %v461, 4294901760
        %v702 = vsub.f32 %v461, %v701
        %703 = vmatpush1.msra.mxu0 %v702
        %704 = vmatprep.subr.mxu0 0.0
        %705 = vmatpush1.msra.mxu0 0.0
        %706 = vmatprep.subr.mxu0 0.0
        %707 = vmatpush1.msra.mxu0 0.0
        %708 = vmatprep.subr.mxu0 0.0
        %709 = vmatpush1.msra.mxu0 0.0
        %710 = vmatprep.subr.mxu0 0.0
        %711 = vmatpush1.msra.mxu0 0.0
        %712 = vmatprep.subr.mxu0 0.0
        %713 = vmatpush1.msra.mxu0 0.0
        %714 = vmatprep.subr.mxu0 0.0
        %715 = vmatpush1.msra.mxu0 0.0
        %716 = vmatprep.subr.mxu0 0.0
        %717 = vmatpush1.msra.mxu0 0.0
        %718 = vmatprep.subr.mxu0 0.0
        %719 = vmatpush1.msra.mxu0 0.0
        %720 = vmatprep.subr.mxu0 0.0
        %721 = vmatpush1.msra.mxu0 0.0
        %722 = vmatprep.subr.mxu0 0.0
        %723 = vmatpush1.msra.mxu0 0.0
        %724 = vmatprep.subr.mxu0 0.0
        %725 = vmatpush1.msra.mxu0 0.0
        %726 = vmatprep.subr.mxu0 0.0
        %727 = vmatpush1.msra.mxu0 0.0
        %728 = vmatprep.subr.mxu0 0.0
        %729 = vmatpush1.msra.mxu0 0.0
        %730 = vmatprep.subr.mxu0 0.0
        %731 = vmatpush1.msra.mxu0 0.0
        %732 = vmatprep.subr.mxu0 0.0
        %733 = vmatpush1.msra.mxu0 0.0
        %734 = vmatprep.subr.mxu0 0.0
        %735 = vmatpush1.msra.mxu0 0.0
        %736 = vmatprep.subr.mxu0 0.0
        %737 = vmatpush1.msra.mxu0 0.0
        %738 = vmatprep.subr.mxu0 0.0
        %739 = vmatpush1.msra.mxu0 0.0
        %740 = vmatprep.subr.mxu0 0.0
        %741 = vmatpush1.msra.mxu0 0.0
        %742 = vmatprep.subr.mxu0 0.0
        %743 = vmatpush1.msra.mxu0 0.0
        %744 = vmatprep.subr.mxu0 0.0
        %745 = vmatpush1.msra.mxu0 0.0
        %746 = vmatprep.subr.mxu0 0.0
        %747 = vmatpush1.msra.mxu0 0.0
        %748 = vmatprep.subr.mxu0 0.0
        %749 = vmatpush1.msra.mxu0 0.0
        %750 = vmatprep.subr.mxu0 0.0
        %751 = vmatpush1.msra.mxu0 0.0
        %752 = vmatprep.subr.mxu0 0.0
        %753 = vmatpush1.msra.mxu0 0.0
        %754 = vmatprep.subr.mxu0 0.0
        %755 = vmatpush1.msra.mxu0 0.0
        %756 = vmatprep.subr.mxu0 0.0
        %757 = vmatpush1.msra.mxu0 0.0
        %758 = vmatprep.mubr.f32.mxu0 0.0
        %v759 = vand.u32 %v457, 4294901760
        %v760 = vsub.f32 %v457, %v759
        %761 = vmatmul.mubr.f32.gmra.mrb[0].mxu0 %v760
        %v762 = vpop.f32.mrb[0].mxu0
        %v763 = vadd.f32 %v670, %v762
        %v764 = vpop.f32.mrb[0].mxu0
        %v765 = vadd.f32 %v672, %v764
        %766 = vdwg.mxu0
        %v767 = vand.u32 %v446, 4294901760
        %768 = vmatprep.subr.mxu0 %v767
        %v769 = vand.u32 %v445, 4294901760
        %770 = vmatpush1.msra.mxu0 %v769
        %v771 = vand.u32 %v448, 4294901760
        %772 = vmatprep.subr.mxu0 %v771
        %v773 = vand.u32 %v447, 4294901760
        %774 = vmatpush1.msra.mxu0 %v773
        %v775 = vand.u32 %v450, 4294901760
        %776 = vmatprep.subr.mxu0 %v775
        %v777 = vand.u32 %v449, 4294901760
        %778 = vmatpush1.msra.mxu0 %v777
        %v779 = vand.u32 %v452, 4294901760
        %780 = vmatprep.subr.mxu0 %v779
        %v781 = vand.u32 %v451, 4294901760
        %782 = vmatpush1.msra.mxu0 %v781
        %v783 = vand.u32 %v464, 4294901760
        %784 = vmatprep.subr.mxu0 %v783
        %v785 = vand.u32 %v461, 4294901760
        %786 = vmatpush1.msra.mxu0 %v785
        %787 = vmatprep.subr.mxu0 0.0
        %788 = vmatpush1.msra.mxu0 0.0
        %789 = vmatprep.subr.mxu0 0.0
        %790 = vmatpush1.msra.mxu0 0.0
        %791 = vmatprep.subr.mxu0 0.0
        %792 = vmatpush1.msra.mxu0 0.0
        %793 = vmatprep.subr.mxu0 0.0
        %794 = vmatpush1.msra.mxu0 0.0
        %795 = vmatprep.subr.mxu0 0.0
        %796 = vmatpush1.msra.mxu0 0.0
        %797 = vmatprep.subr.mxu0 0.0
        %798 = vmatpush1.msra.mxu0 0.0
        %799 = vmatprep.subr.mxu0 0.0
        %800 = vmatpush1.msra.mxu0 0.0
        %801 = vmatprep.subr.mxu0 0.0
        %802 = vmatpush1.msra.mxu0 0.0
        %803 = vmatprep.subr.mxu0 0.0
        %804 = vmatpush1.msra.mxu0 0.0
        %805 = vmatprep.subr.mxu0 0.0
        %806 = vmatpush1.msra.mxu0 0.0
        %807 = vmatprep.subr.mxu0 0.0
        %808 = vmatpush1.msra.mxu0 0.0
        %809 = vmatprep.subr.mxu0 0.0
        %810 = vmatpush1.msra.mxu0 0.0
        %811 = vmatprep.subr.mxu0 0.0
        %812 = vmatpush1.msra.mxu0 0.0
        %813 = vmatprep.subr.mxu0 0.0
        %814 = vmatpush1.msra.mxu0 0.0
        %815 = vmatprep.subr.mxu0 0.0
        %816 = vmatpush1.msra.mxu0 0.0
        %817 = vmatprep.subr.mxu0 0.0
        %818 = vmatpush1.msra.mxu0 0.0
        %819 = vmatprep.subr.mxu0 0.0
        %820 = vmatpush1.msra.mxu0 0.0
        %821 = vmatprep.subr.mxu0 0.0
        %822 = vmatpush1.msra.mxu0 0.0
        %823 = vmatprep.subr.mxu0 0.0
        %824 = vmatpush1.msra.mxu0 0.0
        %825 = vmatprep.subr.mxu0 0.0
        %826 = vmatpush1.msra.mxu0 0.0
        %827 = vmatprep.subr.mxu0 0.0
        %828 = vmatpush1.msra.mxu0 0.0
        %829 = vmatprep.subr.mxu0 0.0
        %830 = vmatpush1.msra.mxu0 0.0
        %831 = vmatprep.subr.mxu0 0.0
        %832 = vmatpush1.msra.mxu0 0.0
        %833 = vmatprep.subr.mxu0 0.0
        %834 = vmatpush1.msra.mxu0 0.0
        %835 = vmatprep.subr.mxu0 0.0
        %836 = vmatpush1.msra.mxu0 0.0
        %837 = vmatprep.subr.mxu0 0.0
        %838 = vmatpush1.msra.mxu0 0.0
        %839 = vmatprep.subr.mxu0 0.0
        %840 = vmatpush1.msra.mxu0 0.0
        %841 = vmatprep.mubr.f32.mxu0 0.0
        %v842 = vand.u32 %v457, 4294901760
        %v843 = vsub.f32 %v457, %v842
        %v844 = vand.u32 %v843, 4294901760
        %845 = vmatmul.mubr.f32.gmra.mrb[0].mxu0 %v844
        %v846 = vpop.f32.mrb[0].mxu0
        %v847 = vadd.f32 %v763, %v846
        %v848 = vpop.f32.mrb[0].mxu0
        %v849 = vadd.f32 %v765, %v848
        %850 = vdwg.mxu0
        %v851 = vand.u32 %v446, 4294901760
        %v852 = vsub.f32 %v446, %v851
        %v853 = vand.u32 %v852, 4294901760
        %854 = vmatprep.subr.mxu0 %v853
        %v855 = vand.u32 %v445, 4294901760
        %v856 = vsub.f32 %v445, %v855
        %v857 = vand.u32 %v856, 4294901760
        %858 = vmatpush1.msra.mxu0 %v857
        %v859 = vand.u32 %v448, 4294901760
        %v860 = vsub.f32 %v448, %v859
        %v861 = vand.u32 %v860, 4294901760
        %862 = vmatprep.subr.mxu0 %v861
        %v863 = vand.u32 %v447, 4294901760
        %v864 = vsub.f32 %v447, %v863
        %v865 = vand.u32 %v864, 4294901760
        %866 = vmatpush1.msra.mxu0 %v865
        %v867 = vand.u32 %v450, 4294901760
        %v868 = vsub.f32 %v450, %v867
        %v869 = vand.u32 %v868, 4294901760
        %870 = vmatprep.subr.mxu0 %v869
        %v871 = vand.u32 %v449, 4294901760
        %v872 = vsub.f32 %v449, %v871
        %v873 = vand.u32 %v872, 4294901760
        %874 = vmatpush1.msra.mxu0 %v873
        %v875 = vand.u32 %v452, 4294901760
        %v876 = vsub.f32 %v452, %v875
        %v877 = vand.u32 %v876, 4294901760
        %878 = vmatprep.subr.mxu0 %v877
        %v879 = vand.u32 %v451, 4294901760
        %v880 = vsub.f32 %v451, %v879
        %v881 = vand.u32 %v880, 4294901760
        %882 = vmatpush1.msra.mxu0 %v881
        %v883 = vand.u32 %v464, 4294901760
        %v884 = vsub.f32 %v464, %v883
        %v885 = vand.u32 %v884, 4294901760
        %886 = vmatprep.subr.mxu0 %v885
        %v887 = vand.u32 %v461, 4294901760
        %v888 = vsub.f32 %v461, %v887
        %v889 = vand.u32 %v888, 4294901760
        %890 = vmatpush1.msra.mxu0 %v889
        %891 = vmatprep.subr.mxu0 0.0
        %892 = vmatpush1.msra.mxu0 0.0
        %893 = vmatprep.subr.mxu0 0.0
        %894 = vmatpush1.msra.mxu0 0.0
        %895 = vmatprep.subr.mxu0 0.0
        %896 = vmatpush1.msra.mxu0 0.0
        %897 = vmatprep.subr.mxu0 0.0
        %898 = vmatpush1.msra.mxu0 0.0
        %899 = vmatprep.subr.mxu0 0.0
        %900 = vmatpush1.msra.mxu0 0.0
        %901 = vmatprep.subr.mxu0 0.0
        %902 = vmatpush1.msra.mxu0 0.0
        %903 = vmatprep.subr.mxu0 0.0
        %904 = vmatpush1.msra.mxu0 0.0
        %905 = vmatprep.subr.mxu0 0.0
        %906 = vmatpush1.msra.mxu0 0.0
        %907 = vmatprep.subr.mxu0 0.0
        %908 = vmatpush1.msra.mxu0 0.0
        %909 = vmatprep.subr.mxu0 0.0
        %910 = vmatpush1.msra.mxu0 0.0
        %911 = vmatprep.subr.mxu0 0.0
        %912 = vmatpush1.msra.mxu0 0.0
        %913 = vmatprep.subr.mxu0 0.0
        %914 = vmatpush1.msra.mxu0 0.0
        %915 = vmatprep.subr.mxu0 0.0
        %916 = vmatpush1.msra.mxu0 0.0
        %917 = vmatprep.subr.mxu0 0.0
        %918 = vmatpush1.msra.mxu0 0.0
        %919 = vmatprep.subr.mxu0 0.0
        %920 = vmatpush1.msra.mxu0 0.0
        %921 = vmatprep.subr.mxu0 0.0
        %922 = vmatpush1.msra.mxu0 0.0
        %923 = vmatprep.subr.mxu0 0.0
        %924 = vmatpush1.msra.mxu0 0.0
        %925 = vmatprep.subr.mxu0 0.0
        %926 = vmatpush1.msra.mxu0 0.0
        %927 = vmatprep.subr.mxu0 0.0
        %928 = vmatpush1.msra.mxu0 0.0
        %929 = vmatprep.subr.mxu0 0.0
        %930 = vmatpush1.msra.mxu0 0.0
        %931 = vmatprep.subr.mxu0 0.0
        %932 = vmatpush1.msra.mxu0 0.0
        %933 = vmatprep.subr.mxu0 0.0
        %934 = vmatpush1.msra.mxu0 0.0
        %935 = vmatprep.subr.mxu0 0.0
        %936 = vmatpush1.msra.mxu0 0.0
        %937 = vmatprep.subr.mxu0 0.0
        %938 = vmatpush1.msra.mxu0 0.0
        %939 = vmatprep.subr.mxu0 0.0
        %940 = vmatpush1.msra.mxu0 0.0
        %941 = vmatprep.subr.mxu0 0.0
        %942 = vmatpush1.msra.mxu0 0.0
        %943 = vmatprep.subr.mxu0 0.0
        %944 = vmatpush1.msra.mxu0 0.0
        %945 = vmatprep.mubr.f32.mxu0 0.0
        %v946 = vand.u32 %v457, 4294901760
        %947 = vmatmul.mubr.f32.gmra.mrb[0].mxu0 %v946
        %v948 = vpop.f32.mrb[0].mxu0
        %v949 = vadd.f32 %v847, %v948
        %v950 = vpop.f32.mrb[0].mxu0
        %v951 = vadd.f32 %v849, %v950
        %952 = vdwg.mxu0
        %v953 = vand.u32 %v446, 4294901760
        %954 = vmatprep.subr.mxu0 %v953
        %v955 = vand.u32 %v445, 4294901760
        %956 = vmatpush1.msra.mxu0 %v955
        %v957 = vand.u32 %v448, 4294901760
        %958 = vmatprep.subr.mxu0 %v957
        %v959 = vand.u32 %v447, 4294901760
        %960 = vmatpush1.msra.mxu0 %v959
        %v961 = vand.u32 %v450, 4294901760
        %962 = vmatprep.subr.mxu0 %v961
        %v963 = vand.u32 %v449, 4294901760
        %964 = vmatpush1.msra.mxu0 %v963
        %v965 = vand.u32 %v452, 4294901760
        %966 = vmatprep.subr.mxu0 %v965
        %v967 = vand.u32 %v451, 4294901760
        %968 = vmatpush1.msra.mxu0 %v967
        %v969 = vand.u32 %v464, 4294901760
        %970 = vmatprep.subr.mxu0 %v969
        %v971 = vand.u32 %v461, 4294901760
        %972 = vmatpush1.msra.mxu0 %v971
        %973 = vmatprep.subr.mxu0 0.0
        %974 = vmatpush1.msra.mxu0 0.0
        %975 = vmatprep.subr.mxu0 0.0
        %976 = vmatpush1.msra.mxu0 0.0
        %977 = vmatprep.subr.mxu0 0.0
        %978 = vmatpush1.msra.mxu0 0.0
        %979 = vmatprep.subr.mxu0 0.0
        %980 = vmatpush1.msra.mxu0 0.0
        %981 = vmatprep.subr.mxu0 0.0
        %982 = vmatpush1.msra.mxu0 0.0
        %983 = vmatprep.subr.mxu0 0.0
        %984 = vmatpush1.msra.mxu0 0.0
        %985 = vmatprep.subr.mxu0 0.0
        %986 = vmatpush1.msra.mxu0 0.0
        %987 = vmatprep.subr.mxu0 0.0
        %988 = vmatpush1.msra.mxu0 0.0
        %989 = vmatprep.subr.mxu0 0.0
        %990 = vmatpush1.msra.mxu0 0.0
        %991 = vmatprep.subr.mxu0 0.0
        %992 = vmatpush1.msra.mxu0 0.0
        %993 = vmatprep.subr.mxu0 0.0
        %994 = vmatpush1.msra.mxu0 0.0
        %995 = vmatprep.subr.mxu0 0.0
        %996 = vmatpush1.msra.mxu0 0.0
        %997 = vmatprep.subr.mxu0 0.0
        %998 = vmatpush1.msra.mxu0 0.0
        %999 = vmatprep.subr.mxu0 0.0
        %1000 = vmatpush1.msra.mxu0 0.0
        %1001 = vmatprep.subr.mxu0 0.0
        %1002 = vmatpush1.msra.mxu0 0.0
        %1003 = vmatprep.subr.mxu0 0.0
        %1004 = vmatpush1.msra.mxu0 0.0
        %1005 = vmatprep.subr.mxu0 0.0
        %1006 = vmatpush1.msra.mxu0 0.0
        %1007 = vmatprep.subr.mxu0 0.0
        %1008 = vmatpush1.msra.mxu0 0.0
        %1009 = vmatprep.subr.mxu0 0.0
        %1010 = vmatpush1.msra.mxu0 0.0
        %1011 = vmatprep.subr.mxu0 0.0
        %1012 = vmatpush1.msra.mxu0 0.0
        %1013 = vmatprep.subr.mxu0 0.0
        %1014 = vmatpush1.msra.mxu0 0.0
        %1015 = vmatprep.subr.mxu0 0.0
        %1016 = vmatpush1.msra.mxu0 0.0
        %1017 = vmatprep.subr.mxu0 0.0
        %1018 = vmatpush1.msra.mxu0 0.0
        %1019 = vmatprep.subr.mxu0 0.0
        %1020 = vmatpush1.msra.mxu0 0.0
        %1021 = vmatprep.subr.mxu0 0.0
        %1022 = vmatpush1.msra.mxu0 0.0
        %1023 = vmatprep.subr.mxu0 0.0
        %1024 = vmatpush1.msra.mxu0 0.0
        %1025 = vmatprep.subr.mxu0 0.0
        %1026 = vmatpush1.msra.mxu0 0.0
        %1027 = vmatprep.mubr.f32.mxu0 0.0
        %v1028 = vand.u32 %v457, 4294901760
        %1029 = vmatmul.mubr.f32.gmra.mrb[0].mxu0 %v1028
        %v1030 = vpop.f32.mrb[0].mxu0
        %v1031 = vadd.f32 %v949, %v1030
        %v1032 = vpop.f32.mrb[0].mxu0
        %v1033 = vadd.f32 %v951, %v1032
        %1034 = vdwg.mxu0
        %v1035 = vmul.f32 %v1031, %v1031
        %v1036 = vmul.f32 %v1033, %v1033
        %v1037 = vrot.slane %v1035, 4
        %v1038 = vadd.f32 %v1035, %v1037
        %v1039 = vrot.slane %v1038, 2
        %v1040 = vadd.f32 %v1038, %v1039
        %v1041 = vrot.slane %v1040, 1
        %v1042 = vadd.f32 %v1040, %v1041
        %v1043 = vrot.slane %v1036, 4
        %v1044 = vadd.f32 %v1036, %v1043
        %v1045 = vrot.slane %v1044, 2
        %v1046 = vadd.f32 %v1044, %v1045
        %v1047 = vrot.slane %v1046, 1
        %v1048 = vadd.f32 %v1046, %v1047
        %v1049 = vmul.f32 %v1042, 0.125
        %v1050 = vmul.f32 %v1048, 0.125
        %v1051 = vadd.f32 %v1049, 1e-08
        %v1052 = vadd.f32 %v1050, 1e-08
        %v1053 = vrsqrt.pop %v1051
        %v1054 = vrsqrt.pop %v1052
        %v1055 = vmul.f32 %v1031, %v1053
        %v1056 = vmul.f32 %v1033, %v1054
        %1057 = vst [vmem:[%s213] sm:$0xff] %v1055
        %1058 = vst [vmem:[%s213 + $0x8] sm:$0xff] %v1056
        %s1059 = sand.u32 %s97, 1
        %s1060 = scalar_lea.sflag [#allocation5], %s1059
        %s1061 = sand.u32 %s97, 1
        %s1062 = smul.addr %s1061, 16
        %s1063 = scalar_lea.vmem [#allocation9], %s1062
        // Predicated region
        $region45: #{tpu_custom_call.1} parent=31 // pred_check
          %p1064 = pneg %p107
        $region46: #{tpu_custom_call.1} parent=31 // pred_check_branch
          %1066 = sbr.rel (%p1064) target = $region48
        $region47: #{tpu_custom_call.1} parent=31 // pred_region
          %s1068 = ssub.s32 256, 256
          %1069 = vsyncadd %s1060, %s1068
          %s1070 = smul.addr %s21, 2
          %s1071 = smul.addr %s1070, 128
          %s1072 = scalar_lea.hbm %s3, %s1071
          %s1074 = sshll.u32 %s1063, 4
          %s1075 = int_to_ptr.vmem [resolvable:$true] %s1074
          %1077 = dma.vmem_to_hbm [thread:$0]  %s1075, 256, %s1072, %s1060
        $region48: #{tpu_custom_call.1} parent=31 // pred_fallthru
          _
      $region32: #{tpu_custom_call.1} parent=5 // pred_fallthru
        _
      %p1078 = scmp.le.s32.totalorder 2, %s16
      // Predicated region
      $region49: #{tpu_custom_call.1} parent=5 // pred_check
        %p1079 = pneg %p1078
      $region50: #{tpu_custom_call.1} parent=5 // pred_check_branch
        %1081 = sbr.rel (%p1079) target = $region52
      $region51: #{tpu_custom_call.1} parent=5 // pred_region
        %s1082 = ssub.s32 %s16, 2
        // Predicated region
        $region53: #{tpu_custom_call.1} parent=51 // pred_check
          %p1083 = pneg %p113
        $region54: #{tpu_custom_call.1} parent=51 // pred_check_branch
          %1085 = sbr.rel (%p1083) target = $region56
        $region55: #{tpu_custom_call.1} parent=51 // pred_region
          %s1086 = sand.u32 %s98, 1
          %s1087 = scalar_lea.sflag [#allocation5], %s1086
          %s1088 = sand.u32 %s98, 1
          %s1089 = smul.addr %s1088, 16
          %s1090 = scalar_lea.vmem [#allocation9], %s1089
          %1091 = dma.done %s1087, 256
        $region56: #{tpu_custom_call.1} parent=51 // pred_fallthru
          _
      $region52: #{tpu_custom_call.1} parent=5 // pred_fallthru
        _
    $region6: #{tpu_custom_call.1} parent=1 // loop_footer
      %s20 = sadd.s32 1, %s16
    $region7: #{tpu_custom_call.1} parent=1 // loop_footer_branch
      %15 = sbr.rel target = $region3
    $region8: #{tpu_custom_call.1} parent=1 // loop_exit
      _
    %1092 = vsyncpa [#allocation4], 1
    %s1093 = scalar_lea.sflag [#allocation4], 1
    %1094 = vsyncpa %s1093, 1
    %1095 = vsyncpa [#allocation7], 1
    %1096 = vsyncpa [#allocation5], 1
    %s1097 = scalar_lea.sflag [#allocation5], 1
    %1098 = vsyncpa %s1097, 1

</llo_original>
